<compile_context>
chip_gen: v6e
topology: v6e:2x2x1
jax: 0.10.0
libtpu: 0.0.40
codegen_flags: <defaults>
</compile_context>

<pallas_src>
import math

import jax
import jax.numpy as jnp
from jax.experimental import pallas as pl
from jax.experimental.pallas import tpu as pltpu


_INV_SQRT2 = 1.0 / math.sqrt(2.0)
LANE = 128


def _gelu_erf_f32(h):
    # Exact (erf) GELU in f32 -- matches torch.nn.GELU default numerics.
    # NOTE: on v6e/v7x a bf16 GELU or a tanh-approx GELU (EUP) would shave VALU
    # cycles, but it changes numerics vs torch's erf default, so we keep f32.
    return 0.5 * h * (1.0 + jax.lax.erf(h * _INV_SQRT2))


# ----------------------------- kernels ---------------------------------------


def _mlp_kernel_resident(x_ref, w1_ref, b1_ref, w2_ref, b2_ref, o_ref):
    """Weights fully VMEM-resident: grid over row tiles only, no accumulator."""
    h = jnp.dot(x_ref[...], w1_ref[...], preferred_element_type=jnp.float32)
    h = _gelu_erf_f32(h + b1_ref[...])
    # dropout(p=0.0) is the identity -> no-op.
    # TODO(synk): for drop > 0 use pltpu.prng_seed + pltpu.prng_random_bits in-kernel.
    y = jnp.dot(h.astype(w2_ref.dtype), w2_ref[...],
                preferred_element_type=jnp.float32)
    o_ref[...] = (y + b2_ref[...]).astype(o_ref.dtype)


def _mlp_kernel_htiled(x_ref, w1_ref, b1_ref, w2_ref, b2_ref, o_ref, acc_ref):
    """Hidden dim tiled (grid axis 1, 'arbitrary' reduction) with f32 accumulator."""
    h_idx = pl.program_id(1)

    @pl.when(h_idx == 0)
    def _init():
        acc_ref[...] = jnp.zeros_like(acc_ref)

    h = jnp.dot(x_ref[...], w1_ref[...], preferred_element_type=jnp.float32)
    h = _gelu_erf_f32(h + b1_ref[...])
    acc_ref[...] += jnp.dot(h.astype(w2_ref.dtype), w2_ref[...],
                            preferred_element_type=jnp.float32)

    @pl.when(h_idx == pl.num_programs(1) - 1)
    def _finalize():
        o_ref[...] = (acc_ref[...] + b2_ref[...]).astype(o_ref.dtype)


# ----------------------------- wrapper ----------------------------------------


def _round_up(n, m):
    return ((n + m - 1) // m) * m


def _vmem_capacity_bytes():
    try:
        cap = getattr(pltpu.get_tpu_info(), "vmem_capacity_bytes", None)
        if cap:
            return int(cap)
    except Exception:
        pass
    return 64 * 1024 * 1024  # conservative fallback (v7x per-TensorCore)


def mlp_pallas(x, w1, b1, w2, b2, *, compute_dtype=jnp.bfloat16,
               row_tile=None, hidden_tile=None):
    """Fused MLP forward.

    x : [..., D] ; w1: [D, H] ; b1: [H] ; w2: [H, O] ; b2: [O]
    Returns [..., O] in x.dtype.  compute_dtype controls the MXU operand dtype
    (default bfloat16); accumulation is always f32; bias add + GELU stay in f32.
    """
    orig_dtype = x.dtype
    lead = x.shape[:-1]
    D = x.shape[-1]
    H = w1.shape[1]
    O = w2.shape[1]
    M = 1
    for s in lead:
        M *= s

    c_size = jnp.dtype(compute_dtype).itemsize
    o_size = jnp.dtype(orig_dtype).itemsize

    D_pad = _round_up(D, LANE)
    O_pad = _round_up(O, LANE)
    H_full = _round_up(H, LANE)

    # ---- row tile (sublane-aligned) -----------------------------------------
    tm = min(row_tile if row_tile is not None else 1024, _round_up(M, 8))
    tm = _round_up(tm, 8)
    M_pad = _round_up(M, tm)
    # Keep >= 2 row tiles so megacore sharding of the "parallel" axis engages
    # (v7x has 2 TensorCores); don't bother for tiny M.
    if M_pad // tm == 1 and M > 256:
        tm = _round_up((M + 1) // 2, 8)
        M_pad = _round_up(M, tm)

    usable_vmem = int(_vmem_capacity_bytes() * 0.85)

    # ---- VMEM-footprint estimates (double-buffered inputs/outputs) -----------
    def resident_bytes(tm_):
        return (2 * c_size * tm_ * D_pad            # x tile (2 bufs)
                + 2 * o_size * tm_ * O_pad          # out tile (2 bufs)
                + 2 * c_size * D_pad * H_full       # W1 (conservatively 2 bufs)
                + 2 * c_size * H_full * O_pad       # W2
                + 2 * 4 * (H_full + O_pad)          # biases
                + 4 * tm_ * H_full                  # f32 hidden intermediate
                + c_size * tm_ * H_full             # cast copy of hidden
                + 4 * tm_ * O_pad)                  # f32 fc2 result

    def tiled_bytes(tm_, th_):
        return (2 * c_size * (tm_ * D_pad + D_pad * th_ + th_ * O_pad)
                + 2 * 4 * (th_ + O_pad)
                + 2 * o_size * tm_ * O_pad
                + 4 * tm_ * O_pad                   # acc scratch
                + 4 * tm_ * th_                     # f32 hidden intermediate
                + c_size * tm_ * th_)               # cast copy of hidden

    # ---- hidden-dim plan ------------------------------------------------------
    force_tiled = False
    th_user = None
    if hidden_tile is not None:
        th_user = max(LANE, _round_up(hidden_tile, LANE))
        if th_user < H_full:
            force_tiled = True

    use_resident = (not force_tiled) and (resident_bytes(tm) * 1.3 <= usable_vmem)

    if use_resident:
        th = H_full
        H_pad = H_full
    else:
        if force_tiled:
            th = th_user
        else:
            th = min(1024, H_full)
            if H_full >= 256:
                th = max(th, 256)      # DMA-chunk / MXU-feeding floor
        th = min(th, H_full)
        H_pad = _round_up(H, th)
        # Shrink (rarely needed) until the tile plan fits VMEM.
        while tiled_bytes(tm, th) * 1.3 > usable_vmem and th > 256:
            th = max(256, _round_up(th // 2, LANE))
            H_pad = _round_up(H, th)
        while tiled_bytes(tm, th) * 1.3 > usable_vmem and tm > 256:
            tm = max(256, _round_up(tm // 2, 8))
            M_pad = _round_up(M, tm)

    # ---- pad + cast (skipped when already aligned / right dtype) -------------
    # Zero padding is exact: padded x cols x zero W1 rows contribute 0; padded
    # hidden cols have b1 = 0 so GELU(0) = 0 against zero W2 rows; padded output
    # cols / rows are sliced off.
    def _pad2(a, rows, cols, dtype):
        pr, pc = rows - a.shape[0], cols - a.shape[1]
        if pr or pc:
            a = jnp.pad(a, ((0, pr), (0, pc)))
        if a.dtype != dtype:
            a = a.astype(dtype)
        return a

    x2 = _pad2(x.reshape(M, D), M_pad, D_pad, compute_dtype)
    w1p = _pad2(w1, D_pad, H_pad, compute_dtype)
    w2p = _pad2(w2, H_pad, O_pad, compute_dtype)
    b1p = _pad2(b1.reshape(1, H), 1, H_pad, jnp.float32)
    b2p = _pad2(b2.reshape(1, O), 1, O_pad, jnp.float32)

    # TODO(synk): mark grid-constant blocks with pipeline_mode=pl.Buffered(1) to
    # drop their useless second pipeline buffer once that path is universally safe.
    if use_resident:
        est = resident_bytes(tm)
        grid_spec = pltpu.PrefetchScalarGridSpec(
            num_scalar_prefetch=0,
            grid=(M_pad // tm,),
            in_specs=[
                pl.BlockSpec((tm, D_pad),    lambda i: (i, 0)),   # x row tile
                pl.BlockSpec((D_pad, H_pad), lambda i: (0, 0)),   # W1 (resident)
                pl.BlockSpec((1, H_pad),     lambda i: (0, 0)),   # b1
                pl.BlockSpec((H_pad, O_pad), lambda i: (0, 0)),   # W2 (resident)
                pl.BlockSpec((1, O_pad),     lambda i: (0, 0)),   # b2
            ],
            out_specs=pl.BlockSpec((tm, O_pad), lambda i: (i, 0)),
        )
        kernel = _mlp_kernel_resident
        dims = ("parallel",)
    else:
        est = tiled_bytes(tm, th)
        grid_spec = pltpu.PrefetchScalarGridSpec(
            num_scalar_prefetch=0,
            grid=(M_pad // tm, H_pad // th),
            in_specs=[
                pl.BlockSpec((tm, D_pad), lambda i, h: (i, 0)),   # x row tile
                pl.BlockSpec((D_pad, th), lambda i, h: (0, h)),   # W1 hidden slice
                pl.BlockSpec((1, th),     lambda i, h: (0, h)),   # b1 hidden slice
                pl.BlockSpec((th, O_pad), lambda i, h: (h, 0)),   # W2 hidden slice
                pl.BlockSpec((1, O_pad),  lambda i, h: (0, 0)),   # b2
            ],
            out_specs=pl.BlockSpec((tm, O_pad), lambda i, h: (i, 0)),
            scratch_shapes=[pltpu.VMEM((tm, O_pad), jnp.float32)],
        )
        kernel = _mlp_kernel_htiled
        dims = ("parallel", "arbitrary")

    vmem_limit = min(usable_vmem, max(int(est * 1.5), 32 * 1024 * 1024))

    out = pl.pallas_call(
        kernel,
        out_shape=jax.ShapeDtypeStruct((M_pad, O_pad), orig_dtype),
        grid_spec=grid_spec,
        compiler_params=pltpu.CompilerParams(
            dimension_semantics=dims,
            vmem_limit_bytes=vmem_limit,
        ),
    )(x2, w1p, b1p, w2p, b2p)

    return out[:M, :O].reshape(*lead, O)


# ----------------------------- reference & tests ------------------------------


def mlp_reference(x, w1, b1, w2, b2):
    h = x @ w1 + b1
    h = 0.5 * h * (1.0 + jax.lax.erf(h * _INV_SQRT2))
    return h @ w2 + b2


def _make_params(key, d_in, d_hid, d_out):
    k1, kb1, k2, kb2 = jax.random.split(key, 4)
    bound1 = 1.0 / math.sqrt(d_in)
    w1 = jax.random.uniform(k1, (d_in, d_hid), minval=-bound1, maxval=bound1,
                            dtype=jnp.float32)
    b1 = jax.random.uniform(kb1, (d_hid,), minval=-bound1, maxval=bound1,
                            dtype=jnp.float32)
    bound2 = 1.0 / math.sqrt(d_hid)
    w2 = jax.random.uniform(k2, (d_hid, d_out), minval=-bound2, maxval=bound2,
                            dtype=jnp.float32)
    b2 = jax.random.uniform(kb2, (d_out,), minval=-bound2, maxval=bound2,
                            dtype=jnp.float32)
    return w1, b1, w2, b2


if __name__ == "__main__":
    key = jax.random.PRNGKey(0)
    kx1, kp1, kx2, kp2, kx3, kp3 = jax.random.split(key, 6)

    # --- Test 1: small ViT-like config, f32 compute (tight tolerance),
    #             resident-weight path. ---------------------------------------
    B, N, D, Hid, O = 2, 8, 32, 64, 32
    x = jax.random.normal(kx1, (B, N, D), dtype=jnp.float32)
    w1, b1, w2, b2 = _make_params(kp1, D, Hid, O)
    y = jax.block_until_ready(
        mlp_pallas(x, w1, b1, w2, b2, compute_dtype=jnp.float32))
    y_ref = mlp_reference(x, w1, b1, w2, b2)
    assert y.shape == (B, N, O)
    assert jnp.allclose(y, y_ref, atol=1e-5, rtol=1e-5), "f32 resident mismatch"

    # --- Test 2: ragged sizes forcing the H-tiled accumulator path
    #             (M not a multiple of the row tile, H spans 2 hidden tiles). --
    B2, N2, D2, Hid2, O2 = 2, 13, 48, 200, 40
    x2 = jax.random.normal(kx2, (B2, N2, D2), dtype=jnp.float32)
    p2 = _make_params(kp2, D2, Hid2, O2)
    y2 = jax.block_until_ready(
        mlp_pallas(x2, *p2, compute_dtype=jnp.float32, row_tile=8, hidden_tile=128))
    y2_ref = mlp_reference(x2, *p2)
    assert y2.shape == (B2, N2, O2)
    assert jnp.allclose(y2, y2_ref, atol=1e-5, rtol=1e-5), "tiled mismatch"

    # --- Test 3: default bf16 MXU operands (f32 accumulation), loose tolerance.
    y_bf16 = jax.block_until_ready(mlp_pallas(x, w1, b1, w2, b2))
    assert jnp.max(jnp.abs(y_bf16 - y_ref)) < 0.1, "bf16 path diverged"

    # --- Test 4: multi-row-tile resident path (row-tile split for megacore). --
    B3, N3, D3, Hid3, O3 = 2, 300, 128, 256, 128
    x3 = jax.random.normal(kx3, (B3, N3, D3), dtype=jnp.float32)
    p3 = _make_params(kp3, D3, Hid3, O3)
    y3 = jax.block_until_ready(mlp_pallas(x3, *p3, compute_dtype=jnp.float32))
    y3_ref = mlp_reference(x3, *p3)
    assert jnp.allclose(y3, y3_ref, atol=1e-4, rtol=1e-4), "multi-tile mismatch"

    print("KERNEL_OK")
</pallas_src>

<mosaic_0001>
module attributes {stable_mosaic.version = 11 : i64} {
  func.func @_mlp_kernel_resident(%arg0: i32, %arg1: memref<16x128xf32, #tpu.memory_space<vmem>>, %arg2: memref<128x128xf32, #tpu.memory_space<vmem>>, %arg3: memref<1x128xf32, #tpu.memory_space<vmem>>, %arg4: memref<128x128xf32, #tpu.memory_space<vmem>>, %arg5: memref<1x128xf32, #tpu.memory_space<vmem>>, %arg6: memref<16x128xf32, #tpu.memory_space<vmem>>) attributes {dimension_semantics = [#tpu.dimension_semantics<parallel>], iteration_bounds = array<i64: 1>, scalar_prefetch = 0 : i64, scratch_operands = 0 : i64, tpu.core_type = #tpu.core_type<tc>, window_params = [{transform_indices = @transform_0, window_bounds = array<i64: 16, 128>}, {pipeline_mode = #tpu.pipeline_mode<synchronous>, transform_indices = @transform_1, window_bounds = array<i64: 128, 128>}, {pipeline_mode = #tpu.pipeline_mode<synchronous>, transform_indices = @transform_2, window_bounds = array<i64: 1, 128>}, {pipeline_mode = #tpu.pipeline_mode<synchronous>, transform_indices = @transform_3, window_bounds = array<i64: 128, 128>}, {pipeline_mode = #tpu.pipeline_mode<synchronous>, transform_indices = @transform_4, window_bounds = array<i64: 1, 128>}, {transform_indices = @transform_5, window_bounds = array<i64: 16, 128>}]} {
    %c0 = arith.constant 0 : index
    %c0_0 = arith.constant 0 : index
    %0 = vector.load %arg1[%c0, %c0_0] : memref<16x128xf32, #tpu.memory_space<vmem>>, vector<16x128xf32>
    %c0_1 = arith.constant 0 : index
    %c0_2 = arith.constant 0 : index
    %1 = vector.load %arg2[%c0_1, %c0_2] : memref<128x128xf32, #tpu.memory_space<vmem>>, vector<128x128xf32>
    %cst = arith.constant dense<0.000000e+00> : vector<16x128xf32>
    %2 = tpu.matmul %0, %1, %cst {dimension_numbers = #tpu.dot_dimension_numbers<[1], [0], [0], [1], [0, 0, 1, 1], [], []>} : vector<16x128xf32>, vector<128x128xf32>, vector<16x128xf32> -> vector<16x128xf32>
    %c0_3 = arith.constant 0 : index
    %c0_4 = arith.constant 0 : index
    %3 = vector.load %arg3[%c0_3, %c0_4] : memref<1x128xf32, #tpu.memory_space<vmem>>, vector<1x128xf32>
    %4 = vector.broadcast %3 : vector<1x128xf32> to vector<16x128xf32>
    %5 = arith.addf %2, %4 : vector<16x128xf32>
    %cst_5 = arith.constant 5.000000e-01 : f32
    %6 = vector.broadcast %cst_5 : f32 to vector<16x128xf32>
    %7 = arith.mulf %6, %5 : vector<16x128xf32>
    %cst_6 = arith.constant 0.707106769 : f32
    %8 = vector.broadcast %cst_6 : f32 to vector<16x128xf32>
    %9 = arith.mulf %5, %8 : vector<16x128xf32>
    %10 = math.erf %9 : vector<16x128xf32>
    %cst_7 = arith.constant 1.000000e+00 : f32
    %11 = vector.broadcast %cst_7 : f32 to vector<16x128xf32>
    %12 = arith.addf %11, %10 : vector<16x128xf32>
    %13 = arith.mulf %7, %12 : vector<16x128xf32>
    %c0_8 = arith.constant 0 : index
    %c0_9 = arith.constant 0 : index
    %14 = vector.load %arg4[%c0_8, %c0_9] : memref<128x128xf32, #tpu.memory_space<vmem>>, vector<128x128xf32>
    %cst_10 = arith.constant dense<0.000000e+00> : vector<16x128xf32>
    %15 = tpu.matmul %13, %14, %cst_10 {dimension_numbers = #tpu.dot_dimension_numbers<[1], [0], [0], [1], [0, 0, 1, 1], [], []>} : vector<16x128xf32>, vector<128x128xf32>, vector<16x128xf32> -> vector<16x128xf32>
    %c0_11 = arith.constant 0 : index
    %c0_12 = arith.constant 0 : index
    %16 = vector.load %arg5[%c0_11, %c0_12] : memref<1x128xf32, #tpu.memory_space<vmem>>, vector<1x128xf32>
    %17 = vector.broadcast %16 : vector<1x128xf32> to vector<16x128xf32>
    %18 = arith.addf %15, %17 : vector<16x128xf32>
    %c0_13 = arith.constant 0 : index
    %c0_14 = arith.constant 0 : index
    %19 = vector.load %arg6[%c0_13, %c0_14] : memref<16x128xf32, #tpu.memory_space<vmem>>, vector<16x128xf32>
    tpu.vector_store %arg6[%c0_13, %c0_14], %18 {strides = array<i32>} : memref<16x128xf32, #tpu.memory_space<vmem>>, vector<16x128xf32>,
    return
  }
  func.func @transform_0(%arg0: i32) -> (i32, i32) {
    %c0_i32 = arith.constant 0 : i32
    %c0_i32_0 = arith.constant 0 : i32
    return %arg0, %c0_i32 : i32, i32
  }
  func.func @transform_1(%arg0: i32) -> (i32, i32) {
    %c0_i32 = arith.constant 0 : i32
    %c0_i32_0 = arith.constant 0 : i32
    %c0_i32_1 = arith.constant 0 : i32
    return %c0_i32, %c0_i32_0 : i32, i32
  }
  func.func @transform_2(%arg0: i32) -> (i32, i32) {
    %c0_i32 = arith.constant 0 : i32
    %c0_i32_0 = arith.constant 0 : i32
    %c0_i32_1 = arith.constant 0 : i32
    return %c0_i32, %c0_i32_0 : i32, i32
  }
  func.func @transform_3(%arg0: i32) -> (i32, i32) {
    %c0_i32 = arith.constant 0 : i32
    %c0_i32_0 = arith.constant 0 : i32
    %c0_i32_1 = arith.constant 0 : i32
    return %c0_i32, %c0_i32_0 : i32, i32
  }
  func.func @transform_4(%arg0: i32) -> (i32, i32) {
    %c0_i32 = arith.constant 0 : i32
    %c0_i32_0 = arith.constant 0 : i32
    %c0_i32_1 = arith.constant 0 : i32
    return %c0_i32, %c0_i32_0 : i32, i32
  }
  func.func @transform_5(%arg0: i32) -> (i32, i32) {
    %c0_i32 = arith.constant 0 : i32
    %c0_i32_0 = arith.constant 0 : i32
    return %arg0, %c0_i32 : i32, i32
  }
}

</mosaic_0001>

<llo_original>
// kernel: tpu_custom_call.1
$region0: #{tpu_custom_call.1}
  #allocation0 [shape = 'u32[]', space=smem, size = 0x4, offset = 0x4, fixed_abs, tag = 'smem constant byte address 0x4 - core index']
  #allocation1 [shape = 'u32[144,128]{1,0:T(1,128)}', space=vmem, size = 0x12000, scoped, tag = 'internal scratch']
  %s0 = inlined_call_operand.hbm [shape: f32[16,128], index: 0, kind: input, shape index: {}]
  %s1 = inlined_call_operand.hbm [shape: f32[128,128], index: 1, kind: input, shape index: {}]
  %s2 = inlined_call_operand.vmem [shape: f32[1,128], index: 2, kind: input, shape index: {}]
  %s3 = inlined_call_operand.hbm [shape: f32[128,128], index: 3, kind: input, shape index: {}]
  %s4 = inlined_call_operand.vmem [shape: f32[1,128], index: 4, kind: input, shape index: {}]
  %s5 = inlined_call_operand.hbm [shape: f32[16,128], index: 5, kind: output, shape index: {}]
  %s6 = sld [smem:[#allocation0]]
  $region42: #{tpu_custom_call.1} parent=0
    _
  %s8 = ssub.s32 1, %s6
  %s9 = scalar_select 0, %s8, %s6
  $region1: #{tpu_custom_call.1} parent=0
    #allocation2 [shape = 'u8[8192]{0}', space=vmem, size = 0x2000, scoped, tag = 'input window, operand 0, single buffered']
    #allocation3 [shape = 's32[1]{0}', space=sflag, size = 0x4, scoped, tag = 'scoped memory for tpu_custom_call.1']
    #allocation4 [shape = 's32[1]{0}', space=sflag, size = 0x4, scoped, tag = 'scoped memory for tpu_custom_call.1']
    #allocation5 [shape = 'u8[65536]{0}', space=vmem, size = 0x10000, scoped, tag = 'input window, operand 1, single buffered']
    #allocation6 [shape = 's32[1]{0}', space=sflag, size = 0x4, scoped, tag = 'scoped memory for tpu_custom_call.1']
    #allocation7 [shape = 'u8[65536]{0}', space=vmem, size = 0x10000, scoped, tag = 'input window, operand 3, single buffered']
    #allocation8 [shape = 'u8[8192]{0}', space=vmem, size = 0x2000, scoped, tag = 'output window, operand 0, single buffered']
    %10 = vsyncpa [#allocation3], 0
    %11 = vsyncpa [#allocation6], 0
    %12 = vsyncpa [#allocation4], 0
    // Predicated region
    $region2: #{tpu_custom_call.1} parent=1 // pred_check
      _
    $region3: #{tpu_custom_call.1} parent=1 // pred_check_branch
      %14 = sbr.rel (0) target = $region5
    $region4: #{tpu_custom_call.1} parent=1 // pred_region
      %s16 = ssub.s32 256, 256
      %17 = vsyncadd [#allocation3], %s16
      %s18 = sshll.u32 [#allocation2], 4
      %s19 = int_to_ptr.vmem [resolvable:$true] %s18
      %24 = dma.hbm_to_vmem [thread:$0]  %s0, 256, %s19, [#allocation3], 128, 128, 8
    $region5: #{tpu_custom_call.1} parent=1 // pred_fallthru
      _
    // Predicated region
    $region6: #{tpu_custom_call.1} parent=1 // pred_check
      _
    $region7: #{tpu_custom_call.1} parent=1 // pred_check_branch
      %26 = sbr.rel (0) target = $region9
    $region8: #{tpu_custom_call.1} parent=1 // pred_region
      %s28 = ssub.s32 2048, 2048
      %29 = vsyncadd [#allocation6], %s28
      %s30 = sshll.u32 [#allocation5], 4
      %s31 = int_to_ptr.vmem [resolvable:$true] %s30
      %36 = dma.hbm_to_vmem [thread:$0]  %s1, 2048, %s31, [#allocation6], 128, 128, 8
    $region9: #{tpu_custom_call.1} parent=1 // pred_fallthru
      _
    // Predicated region
    $region10: #{tpu_custom_call.1} parent=1 // pred_check
      _
    $region11: #{tpu_custom_call.1} parent=1 // pred_check_branch
      %38 = sbr.rel (0) target = $region13
    $region12: #{tpu_custom_call.1} parent=1 // pred_region
      _
    $region13: #{tpu_custom_call.1} parent=1 // pred_fallthru
      _
    // Predicated region
    $region14: #{tpu_custom_call.1} parent=1 // pred_check
      _
    $region15: #{tpu_custom_call.1} parent=1 // pred_check_branch
      %40 = sbr.rel (0) target = $region17
    $region16: #{tpu_custom_call.1} parent=1 // pred_region
      %s42 = ssub.s32 2048, 2048
      %43 = vsyncadd [#allocation6], %s42
      %s44 = sshll.u32 [#allocation7], 4
      %s45 = int_to_ptr.vmem [resolvable:$true] %s44
      %50 = dma.hbm_to_vmem [thread:$0]  %s3, 2048, %s45, [#allocation6], 128, 128, 8
    $region17: #{tpu_custom_call.1} parent=1 // pred_fallthru
      _
    // Predicated region
    $region18: #{tpu_custom_call.1} parent=1 // pred_check
      _
    $region19: #{tpu_custom_call.1} parent=1 // pred_check_branch
      %52 = sbr.rel (0) target = $region21
    $region20: #{tpu_custom_call.1} parent=1 // pred_region
      _
    $region21: #{tpu_custom_call.1} parent=1 // pred_fallthru
      _
    // Predicated region
    $region22: #{tpu_custom_call.1} parent=1 // pred_check
      _
    $region23: #{tpu_custom_call.1} parent=1 // pred_check_branch
      %54 = sbr.rel (0) target = $region25
    $region24: #{tpu_custom_call.1} parent=1 // pred_region
      %55 = dma.done [#allocation3], 256
    $region25: #{tpu_custom_call.1} parent=1 // pred_fallthru
      _
    // Predicated region
    $region26: #{tpu_custom_call.1} parent=1 // pred_check
      _
    $region27: #{tpu_custom_call.1} parent=1 // pred_check_branch
      %57 = sbr.rel (0) target = $region29
    $region28: #{tpu_custom_call.1} parent=1 // pred_region
      %58 = dma.done [#allocation6], 2048
    $region29: #{tpu_custom_call.1} parent=1 // pred_fallthru
      _
    // Predicated region
    $region30: #{tpu_custom_call.1} parent=1 // pred_check
      _
    $region31: #{tpu_custom_call.1} parent=1 // pred_check_branch
      %60 = sbr.rel (0) target = $region33
    $region32: #{tpu_custom_call.1} parent=1 // pred_region
      %61 = dma.done [#allocation6], 2048
    $region33: #{tpu_custom_call.1} parent=1 // pred_fallthru
      _
    %v62 = vld [vmem:[#allocation2] sm:$0xff]
    %v63 = vld [vmem:[#allocation2 + $0x8] sm:$0xff]
    %v64 = vld [vmem:[#allocation5] sm:$0xff]
    %v65 = vld [vmem:[#allocation5 + $0x8] sm:$0xff]
    %v66 = vld [vmem:[#allocation5 + $0x10] sm:$0xff]
    %v67 = vld [vmem:[#allocation5 + $0x18] sm:$0xff]
    %v68 = vld [vmem:[#allocation5 + $0x20] sm:$0xff]
    %v69 = vld [vmem:[#allocation5 + $0x28] sm:$0xff]
    %v70 = vld [vmem:[#allocation5 + $0x30] sm:$0xff]
    %v71 = vld [vmem:[#allocation5 + $0x38] sm:$0xff]
    %v72 = vld [vmem:[#allocation5 + $0x40] sm:$0xff]
    %v73 = vld [vmem:[#allocation5 + $0x48] sm:$0xff]
    %v74 = vld [vmem:[#allocation5 + $0x50] sm:$0xff]
    %v75 = vld [vmem:[#allocation5 + $0x58] sm:$0xff]
    %v76 = vld [vmem:[#allocation5 + $0x60] sm:$0xff]
    %v77 = vld [vmem:[#allocation5 + $0x68] sm:$0xff]
    %v78 = vld [vmem:[#allocation5 + $0x70] sm:$0xff]
    %v79 = vld [vmem:[#allocation5 + $0x78] sm:$0xff]
    %v80 = vld [vmem:[%s2] sm:$0x1]
    %v82 = vlaneseq
    %v83 = vshrl.u32 %v82, 7
    %v84 = vsub.s32 0, %v83
    %v85 = vrot.slane %v80, %v84
    %87 = vmatprep.subr.mxu0 0.0
    %88 = vmatpush1.msra.mxu0 %v79
    %89 = vmatprep.subr.mxu0 0.0
    %90 = vmatpush1.msra.mxu0 %v78
    %91 = vmatprep.subr.mxu0 0.0
    %92 = vmatpush1.msra.mxu0 %v77
    %93 = vmatprep.subr.mxu0 0.0
    %94 = vmatpush1.msra.mxu0 %v76
    %95 = vmatprep.subr.mxu0 0.0
    %96 = vmatpush1.msra.mxu0 %v75
    %97 = vmatprep.subr.mxu0 0.0
    %98 = vmatpush1.msra.mxu0 %v74
    %99 = vmatprep.subr.mxu0 0.0
    %100 = vmatpush1.msra.mxu0 %v73
    %101 = vmatprep.subr.mxu0 0.0
    %102 = vmatpush1.msra.mxu0 %v72
    %103 = vmatprep.subr.mxu0 0.0
    %104 = vmatpush1.msra.mxu0 %v71
    %105 = vmatprep.subr.mxu0 0.0
    %106 = vmatpush1.msra.mxu0 %v70
    %107 = vmatprep.subr.mxu0 0.0
    %108 = vmatpush1.msra.mxu0 %v69
    %109 = vmatprep.subr.mxu0 0.0
    %110 = vmatpush1.msra.mxu0 %v68
    %111 = vmatprep.subr.mxu0 0.0
    %112 = vmatpush1.msra.mxu0 %v67
    %113 = vmatprep.subr.mxu0 0.0
    %114 = vmatpush1.msra.mxu0 %v66
    %115 = vmatprep.subr.mxu0 0.0
    %116 = vmatpush1.msra.mxu0 %v65
    %117 = vmatprep.subr.mxu0 0.0
    %118 = vmatpush1.msra.mxu0 %v64
    %119 = vmatprep.subr.mxu0 0.0
    %120 = vmatpush2.msra.mxu0 0.0
    %121 = vmatprep.subr.mxu0 0.0
    %122 = vmatpush2.msra.mxu0 0.0
    %123 = vmatprep.subr.mxu0 0.0
    %124 = vmatpush2.msra.mxu0 0.0
    %125 = vmatprep.subr.mxu0 0.0
    %126 = vmatpush2.msra.mxu0 0.0
    %127 = vmatprep.subr.mxu0 0.0
    %128 = vmatpush2.msra.mxu0 0.0
    %129 = vmatprep.subr.mxu0 0.0
    %130 = vmatpush2.msra.mxu0 0.0
    %131 = vmatprep.subr.mxu0 0.0
    %132 = vmatpush2.msra.mxu0 0.0
    %133 = vmatprep.subr.mxu0 0.0
    %134 = vmatpush2.msra.mxu0 0.0
    %135 = vmatprep.subr.mxu0 0.0
    %136 = vmatpush2.msra.mxu0 0.0
    %137 = vmatprep.subr.mxu0 0.0
    %138 = vmatpush2.msra.mxu0 0.0
    %139 = vmatprep.subr.mxu0 0.0
    %140 = vmatpush2.msra.mxu0 0.0
    %141 = vmatprep.subr.mxu0 0.0
    %142 = vmatpush2.msra.mxu0 0.0
    %143 = vmatprep.subr.mxu0 0.0
    %144 = vmatpush2.msra.mxu0 0.0
    %145 = vmatprep.subr.mxu0 0.0
    %146 = vmatpush2.msra.mxu0 0.0
    %147 = vmatprep.subr.mxu0 0.0
    %148 = vmatpush2.msra.mxu0 0.0
    %149 = vmatprep.subr.mxu0 0.0
    %150 = vmatpush2.msra.mxu0 0.0
    %151 = vmatprep.mubr.f32.mxu0 0.0
    %152 = vmatmul.mubr.f32.gmra.mxu0 %v62
    %v153 = vpop.f32.mrf.mxu0
    %v154 = vadd.f32 %v85, %v153
    %v155 = vpop.f32.mrf.mxu0
    %156 = vmatprep.mubr.f32.mxu0 0.0
    %157 = vmatmul.mubr.f32.gmra.mxu0 %v63
    %v158 = vpop.f32.mrf.mxu0
    %v159 = vadd.f32 %v85, %v158
    %v160 = vpop.f32.mrf.mxu0
    %161 = vdwg.mxu0
    %v162 = vmul.f32 %v154, 0.5
    %v163 = vmul.f32 %v159, 0.5
    %v164 = vmul.f32 %v154, 0.70710677
    %v165 = vmul.f32 %v159, 0.70710677
    %v166 = verf.f32.pop %v164
    %v167 = verf.f32.pop %v165
    %v168 = vadd.f32 %v166, 1.0
    %v169 = vadd.f32 %v167, 1.0
    %v170 = vmul.f32 %v162, %v168
    %v171 = vmul.f32 %v163, %v169
    %v172 = vld [vmem:[#allocation7] sm:$0xff]
    %v173 = vld [vmem:[#allocation7 + $0x8] sm:$0xff]
    %v174 = vld [vmem:[#allocation7 + $0x10] sm:$0xff]
    %v175 = vld [vmem:[#allocation7 + $0x18] sm:$0xff]
    %v176 = vld [vmem:[#allocation7 + $0x20] sm:$0xff]
    %v177 = vld [vmem:[#allocation7 + $0x28] sm:$0xff]
    %v178 = vld [vmem:[#allocation7 + $0x30] sm:$0xff]
    %v179 = vld [vmem:[#allocation7 + $0x38] sm:$0xff]
    %v180 = vld [vmem:[#allocation7 + $0x40] sm:$0xff]
    %v181 = vld [vmem:[#allocation7 + $0x48] sm:$0xff]
    %v182 = vld [vmem:[#allocation7 + $0x50] sm:$0xff]
    %v183 = vld [vmem:[#allocation7 + $0x58] sm:$0xff]
    %v184 = vld [vmem:[#allocation7 + $0x60] sm:$0xff]
    %v185 = vld [vmem:[#allocation7 + $0x68] sm:$0xff]
    %v186 = vld [vmem:[#allocation7 + $0x70] sm:$0xff]
    %v187 = vld [vmem:[#allocation7 + $0x78] sm:$0xff]
    %v188 = vld [vmem:[%s4] sm:$0x1]
    %v190 = vlaneseq
    %v191 = vshrl.u32 %v190, 7
    %v192 = vsub.s32 0, %v191
    %v193 = vrot.slane %v188, %v192
    %195 = vmatprep.subr.mxu0 0.0
    %196 = vmatpush1.msra.mxu0 %v187
    %197 = vmatprep.subr.mxu0 0.0
    %198 = vmatpush1.msra.mxu0 %v186
    %199 = vmatprep.subr.mxu0 0.0
    %200 = vmatpush1.msra.mxu0 %v185
    %201 = vmatprep.subr.mxu0 0.0
    %202 = vmatpush1.msra.mxu0 %v184
    %203 = vmatprep.subr.mxu0 0.0
    %204 = vmatpush1.msra.mxu0 %v183
    %205 = vmatprep.subr.mxu0 0.0
    %206 = vmatpush1.msra.mxu0 %v182
    %207 = vmatprep.subr.mxu0 0.0
    %208 = vmatpush1.msra.mxu0 %v181
    %209 = vmatprep.subr.mxu0 0.0
    %210 = vmatpush1.msra.mxu0 %v180
    %211 = vmatprep.subr.mxu0 0.0
    %212 = vmatpush1.msra.mxu0 %v179
    %213 = vmatprep.subr.mxu0 0.0
    %214 = vmatpush1.msra.mxu0 %v178
    %215 = vmatprep.subr.mxu0 0.0
    %216 = vmatpush1.msra.mxu0 %v177
    %217 = vmatprep.subr.mxu0 0.0
    %218 = vmatpush1.msra.mxu0 %v176
    %219 = vmatprep.subr.mxu0 0.0
    %220 = vmatpush1.msra.mxu0 %v175
    %221 = vmatprep.subr.mxu0 0.0
    %222 = vmatpush1.msra.mxu0 %v174
    %223 = vmatprep.subr.mxu0 0.0
    %224 = vmatpush1.msra.mxu0 %v173
    %225 = vmatprep.subr.mxu0 0.0
    %226 = vmatpush1.msra.mxu0 %v172
    %227 = vmatprep.subr.mxu0 0.0
    %228 = vmatpush2.msra.mxu0 0.0
    %229 = vmatprep.subr.mxu0 0.0
    %230 = vmatpush2.msra.mxu0 0.0
    %231 = vmatprep.subr.mxu0 0.0
    %232 = vmatpush2.msra.mxu0 0.0
    %233 = vmatprep.subr.mxu0 0.0
    %234 = vmatpush2.msra.mxu0 0.0
    %235 = vmatprep.subr.mxu0 0.0
    %236 = vmatpush2.msra.mxu0 0.0
    %237 = vmatprep.subr.mxu0 0.0
    %238 = vmatpush2.msra.mxu0 0.0
    %239 = vmatprep.subr.mxu0 0.0
    %240 = vmatpush2.msra.mxu0 0.0
    %241 = vmatprep.subr.mxu0 0.0
    %242 = vmatpush2.msra.mxu0 0.0
    %243 = vmatprep.subr.mxu0 0.0
    %244 = vmatpush2.msra.mxu0 0.0
    %245 = vmatprep.subr.mxu0 0.0
    %246 = vmatpush2.msra.mxu0 0.0
    %247 = vmatprep.subr.mxu0 0.0
    %248 = vmatpush2.msra.mxu0 0.0
    %249 = vmatprep.subr.mxu0 0.0
    %250 = vmatpush2.msra.mxu0 0.0
    %251 = vmatprep.subr.mxu0 0.0
    %252 = vmatpush2.msra.mxu0 0.0
    %253 = vmatprep.subr.mxu0 0.0
    %254 = vmatpush2.msra.mxu0 0.0
    %255 = vmatprep.subr.mxu0 0.0
    %256 = vmatpush2.msra.mxu0 0.0
    %257 = vmatprep.subr.mxu0 0.0
    %258 = vmatpush2.msra.mxu0 0.0
    %259 = vmatprep.mubr.f32.mxu0 0.0
    %260 = vmatmul.mubr.f32.gmra.mxu0 %v170
    %v261 = vpop.f32.mrf.mxu0
    %v262 = vadd.f32 %v193, %v261
    %v263 = vpop.f32.mrf.mxu0
    %264 = vmatprep.mubr.f32.mxu0 0.0
    %265 = vmatmul.mubr.f32.gmra.mxu0 %v171
    %v266 = vpop.f32.mrf.mxu0
    %v267 = vadd.f32 %v193, %v266
    %v268 = vpop.f32.mrf.mxu0
    %269 = vdwg.mxu0
    %270 = vst [vmem:[#allocation8] sm:$0xff] %v262
    %271 = vst [vmem:[#allocation8 + $0x8] sm:$0xff] %v267
    // Predicated region
    $region34: #{tpu_custom_call.1} parent=1 // pred_check
      _
    $region35: #{tpu_custom_call.1} parent=1 // pred_check_branch
      %273 = sbr.rel (0) target = $region37
    $region36: #{tpu_custom_call.1} parent=1 // pred_region
      %s275 = ssub.s32 256, 256
      %276 = vsyncadd [#allocation4], %s275
      %s277 = sshll.u32 [#allocation8], 4
      %s278 = int_to_ptr.vmem [resolvable:$true] %s277
      %283 = dma.vmem_to_hbm [thread:$0]  %s278, 256, %s5, [#allocation4], 128, 128, 8
    $region37: #{tpu_custom_call.1} parent=1 // pred_fallthru
      _
    // Predicated region
    $region38: #{tpu_custom_call.1} parent=1 // pred_check
      _
    $region39: #{tpu_custom_call.1} parent=1 // pred_check_branch
      %285 = sbr.rel (0) target = $region41
    $region40: #{tpu_custom_call.1} parent=1 // pred_region
      %286 = dma.done [#allocation4], 256
    $region41: #{tpu_custom_call.1} parent=1 // pred_fallthru
      _
    %287 = vsyncpa [#allocation3], 1
    %288 = vsyncpa [#allocation6], 1
    %289 = vsyncpa [#allocation4], 1

</llo_original>
